<compile_context>
chip_gen: v7x
topology: tpu7x:2x2x1
jax: 0.10.0
libtpu: 0.0.40
codegen_flags: <defaults>
</compile_context>

<pallas_src>
import functools
import math

import jax
import jax.numpy as jnp
from jax.experimental import pallas as pl
from jax.experimental.pallas import tpu as pltpu


# ---------------------------------------------------------------------------
# Kernels
# ---------------------------------------------------------------------------
def _glu_split_kernel(a_ref, g_ref, o_ref):
    """a_ref: 'out' half tile, g_ref: 'gate' half tile (same shape)."""
    a = a_ref[...].astype(jnp.float32)
    g = g_ref[...].astype(jnp.float32)
    o_ref[...] = (a * jax.nn.sigmoid(g)).astype(o_ref.dtype)


def _glu_fused_kernel(x_ref, o_ref, *, half):
    """x_ref: full-width tile (rt, 2*half); slice the halves in-kernel.

    When `half` is a multiple of 128 the slice is at a lane-aligned boundary
    and costs nothing (no relayout)."""
    x = x_ref[...].astype(jnp.float32)
    out = x[:, :half]
    gate = x[:, half:]
    o_ref[...] = (out * jax.nn.sigmoid(gate)).astype(o_ref.dtype)


# ---------------------------------------------------------------------------
# Tiling helpers
# ---------------------------------------------------------------------------
def _largest_aligned_divisor(h, max_tile):
    """Largest multiple-of-128 divisor of h that is <= max_tile (h % 128 == 0)."""
    t = min(h, max_tile)
    t -= t % 128
    while t >= 128:
        if h % t == 0:
            return t
        t -= 128
    return 128  # 128 always divides h on this path


# ---------------------------------------------------------------------------
# Wrapper
# ---------------------------------------------------------------------------
def glu(x, dim=-1, *, max_col_tile=2048, max_row_tile=None,
        vmem_budget_bytes=24 << 20, vmem_limit_bytes=48 << 20):
    """GLU: split x into two halves along `dim`, return out * sigmoid(gate)."""
    nd = x.ndim
    d = dim % nd
    size = x.shape[d]
    assert size % 2 == 0, "GLU split dimension must be even"
    half_dim = size // 2

    outer = math.prod(x.shape[:d]) if d > 0 else 1
    inner = math.prod(x.shape[d + 1:]) if d + 1 < nd else 1

    H = half_dim * inner          # flattened half-width (out / gate each H cols)
    R = outer
    x2 = x.reshape(R, 2 * H)

    out_dtype = x.dtype
    itemsize = jnp.dtype(out_dtype).itemsize

    cost = pl.CostEstimate(
        flops=4 * R * H,
        transcendentals=R * H,
        bytes_accessed=3 * R * H * itemsize,   # 2H read + H written per row
    )

    def _row_tile(cols_per_row):
        """Largest multiple-of-8 rt with ~6*rt*cols*itemsize <= budget."""
        rt = vmem_budget_bytes // max(1, 6 * cols_per_row * itemsize)
        rt = int(rt) - int(rt) % 8
        rt = max(rt, 8)
        if max_row_tile is not None:
            rt = min(rt, max(8, max_row_tile - max_row_tile % 8))
        if rt >= R:
            return R          # full-extent block: always legal, single row step
        return rt

    # Decide between the two-view "split" path (column-tiled, lane-aligned
    # halves as two BlockSpec views of the same array) and the single-input
    # "fused" path (full-width (rt, 2H) blocks, in-kernel slice).
    use_split = False
    ct = H
    if H % 128 == 0 and H > max_col_tile:
        ct = _largest_aligned_divisor(H, max_col_tile)
        if ct >= 512:
            use_split = True
        else:
            # Degenerate H (no decent 128-multiple divisor): prefer full-width
            # blocks with a budget-reduced row tile; only fall back to tiny
            # column tiles if even rt=8 would not fit the VMEM budget.
            if vmem_budget_bytes // (6 * H * itemsize) >= 8:
                use_split = False
                ct = H
            else:
                use_split = True

    compiler_common = dict(vmem_limit_bytes=vmem_limit_bytes)

    if use_split:
        rt = _row_tile(ct)
        ncb = H // ct                              # column blocks per half
        grid = (pl.cdiv(R, rt), ncb)               # ragged last row block OK
        out2 = pl.pallas_call(
            _glu_split_kernel,
            out_shape=jax.ShapeDtypeStruct((R, H), out_dtype),
            grid_spec=pltpu.PrefetchScalarGridSpec(
                num_scalar_prefetch=0,
                grid=grid,
                in_specs=[
                    pl.BlockSpec((rt, ct), lambda i, j: (i, j)),              # out half
                    pl.BlockSpec((rt, ct), lambda i, j, _n=ncb: (i, j + _n)), # gate half
                ],
                out_specs=pl.BlockSpec((rt, ct), lambda i, j: (i, j)),
            ),
            compiler_params=pltpu.CompilerParams(
                dimension_semantics=("parallel", "parallel"),
                **compiler_common),
            cost_estimate=cost,
        )(x2, x2)   # two read-only views of the same array: no extra HBM traffic
    else:
        # Single input stream: one DMA descriptor + one semaphore per step.
        # Slice at the H boundary in-kernel (free when H % 128 == 0).
        rt = _row_tile(H)                          # footprint ~ 6*rt*H*itemsize
        grid = (pl.cdiv(R, rt),)                   # ragged last row block OK
        out2 = pl.pallas_call(
            functools.partial(_glu_fused_kernel, half=H),
            out_shape=jax.ShapeDtypeStruct((R, H), out_dtype),
            grid_spec=pltpu.PrefetchScalarGridSpec(
                num_scalar_prefetch=0,
                grid=grid,
                in_specs=[pl.BlockSpec((rt, 2 * H), lambda i: (i, 0))],
                out_specs=pl.BlockSpec((rt, H), lambda i: (i, 0)),
            ),
            compiler_params=pltpu.CompilerParams(
                dimension_semantics=("parallel",),
                **compiler_common),
            cost_estimate=cost,
        )(x2)

    new_shape = x.shape[:d] + (half_dim,) + x.shape[d + 1:]
    return out2.reshape(new_shape)


def reference_glu(x, dim=-1):
    out, gate = jnp.split(x, 2, axis=dim)
    return out * jax.nn.sigmoid(gate)


if __name__ == "__main__":
    key = jax.random.PRNGKey(0)
    k1, k2, k3, k4, k5 = jax.random.split(key, 5)

    # Case 1: split along the last dim, lane-dense halves (H = 128) -> fused path.
    x1 = jax.random.normal(k1, (2, 8, 256), dtype=jnp.float32)
    y1 = jax.block_until_ready(glu(x1, dim=-1))
    assert y1.shape == (2, 8, 128)
    assert jnp.allclose(y1, reference_glu(x1, -1), atol=1e-5, rtol=1e-5), \
        "mismatch vs reference (case 1)"

    # Case 2: split along a middle dim (dim=1), exercises the general reshape.
    x2 = jax.random.normal(k2, (2, 64, 16), dtype=jnp.float32)
    y2 = jax.block_until_ready(glu(x2, dim=1))
    assert y2.shape == (2, 32, 16)
    assert jnp.allclose(y2, reference_glu(x2, 1), atol=1e-5, rtol=1e-5), \
        "mismatch vs reference (case 2)"

    # Case 3: non-128-aligned half width -> fallback full-width-block path.
    x3 = jax.random.normal(k3, (2, 8, 64), dtype=jnp.float32)
    y3 = jax.block_until_ready(glu(x3, dim=-1))
    assert y3.shape == (2, 8, 32)
    assert jnp.allclose(y3, reference_glu(x3, -1), atol=1e-5, rtol=1e-5), \
        "mismatch vs reference (case 3)"

    # Case 4: ragged row count (R=100, rt clamped to 64) -> cdiv grid, masked
    # boundary block, no pad / trim round-trips.
    x4 = jax.random.normal(k4, (100, 256), dtype=jnp.float32)
    y4 = jax.block_until_ready(glu(x4, dim=-1, max_row_tile=64))
    assert y4.shape == (100, 128)
    assert jnp.allclose(y4, reference_glu(x4, -1), atol=1e-5, rtol=1e-5), \
        "mismatch vs reference (case 4)"

    # Case 5: wide aligned half (H=4096 > max_col_tile) -> two-view split path.
    x5 = jax.random.normal(k5, (16, 8192), dtype=jnp.float32)
    y5 = jax.block_until_ready(glu(x5, dim=-1))
    assert y5.shape == (16, 4096)
    assert jnp.allclose(y5, reference_glu(x5, -1), atol=1e-5, rtol=1e-5), \
        "mismatch vs reference (case 5)"

    print("KERNEL_OK")
</pallas_src>

<mosaic_0001>
module attributes {stable_mosaic.version = 11 : i64} {
  func.func @_glu_fused_kernel(%arg0: i32, %arg1: memref<16x256xf32, #tpu.memory_space<vmem>>, %arg2: memref<16x128xf32, #tpu.memory_space<vmem>>) attributes {dimension_semantics = [#tpu.dimension_semantics<parallel>], iteration_bounds = array<i64: 1>, scalar_prefetch = 0 : i64, scratch_operands = 0 : i64, tpu.core_type = #tpu.core_type<tc>, window_params = [{transform_indices = @transform_0, window_bounds = array<i64: 16, 256>}, {transform_indices = @transform_1, window_bounds = array<i64: 16, 128>}]} {
    %c0 = arith.constant 0 : index
    %c0_0 = arith.constant 0 : index
    %0 = vector.load %arg1[%c0, %c0_0] : memref<16x256xf32, #tpu.memory_space<vmem>>, vector<16x256xf32>
    %1 = vector.extract_strided_slice %0 {offsets = [0, 0], sizes = [16, 128], strides = [1, 1]} : vector<16x256xf32> to vector<16x128xf32>
    %2 = vector.extract_strided_slice %0 {offsets = [0, 128], sizes = [16, 128], strides = [1, 1]} : vector<16x256xf32> to vector<16x128xf32>
    %3 = arith.negf %2 : vector<16x128xf32>
    %4 = math.exp %3 : vector<16x128xf32>
    %cst = arith.constant 1.000000e+00 : f32
    %5 = vector.broadcast %cst : f32 to vector<16x128xf32>
    %6 = arith.addf %5, %4 : vector<16x128xf32>
    %7 = arith.divf %5, %6 : vector<16x128xf32>
    %8 = arith.mulf %1, %7 : vector<16x128xf32>
    %c0_1 = arith.constant 0 : index
    %c0_2 = arith.constant 0 : index
    %9 = vector.load %arg2[%c0_1, %c0_2] : memref<16x128xf32, #tpu.memory_space<vmem>>, vector<16x128xf32>
    tpu.vector_store %arg2[%c0_1, %c0_2], %8 {strides = array<i32>} : memref<16x128xf32, #tpu.memory_space<vmem>>, vector<16x128xf32>,
    return
  }
  func.func @transform_0(%arg0: i32) -> (i32, i32) {
    %c0_i32 = arith.constant 0 : i32
    %c0_i32_0 = arith.constant 0 : i32
    return %arg0, %c0_i32 : i32, i32
  }
  func.func @transform_1(%arg0: i32) -> (i32, i32) {
    %c0_i32 = arith.constant 0 : i32
    %c0_i32_0 = arith.constant 0 : i32
    return %arg0, %c0_i32 : i32, i32
  }
}

</mosaic_0001>

<llo_original>
// kernel: tpu_custom_call.1
$region0: #{tpu_custom_call.1}
  #allocation0 [shape = 'u32[]', space=smem, size = 0x4, offset = 0x4, fixed_abs, tag = 'smem constant byte address 0x4 - core index']
  #allocation1 [shape = 'u32[144,128]{1,0:T(1,128)}', space=vmem, size = 0x12000, scoped, tag = 'internal scratch']
  %s0 = inlined_call_operand.hbm [shape: f32[16,256], index: 0, kind: input, shape index: {}]
  %s1 = inlined_call_operand.hbm [shape: f32[16,128], index: 1, kind: output, shape index: {}]
  %s2 = sld [smem:[#allocation0]]
  $region18: #{tpu_custom_call.1} parent=0
    _
  %s4 = ssub.s32 1, %s2
  %s5 = scalar_select 0, %s4, %s2
  $region1: #{tpu_custom_call.1} parent=0
    #allocation2 [shape = 'u8[16384]{0}', space=vmem, size = 0x4000, scoped, tag = 'input window, operand 0, single buffered']
    #allocation3 [shape = 's32[1]{0}', space=sflag, size = 0x4, scoped, tag = 'scoped memory for tpu_custom_call.1']
    #allocation4 [shape = 's32[1]{0}', space=sflag, size = 0x4, scoped, tag = 'scoped memory for tpu_custom_call.1']
    #allocation5 [shape = 'u8[8192]{0}', space=vmem, size = 0x2000, scoped, tag = 'output window, operand 0, single buffered']
    %6 = vsyncpa [#allocation3], 0
    %7 = vsyncpa [#allocation4], 0
    // Predicated region
    $region2: #{tpu_custom_call.1} parent=1 // pred_check
      _
    $region3: #{tpu_custom_call.1} parent=1 // pred_check_branch
      %9 = sbr.rel (0) target = $region5
    $region4: #{tpu_custom_call.1} parent=1 // pred_region
      %s11 = ssub.s32 512, 512
      %12 = vsyncadd [#allocation3], %s11
      %s13 = sshll.u32 [#allocation2], 4
      %s14 = int_to_ptr.vmem [resolvable:$true] %s13
      %19 = dma.hbm_to_vmem [thread:$0]  %s0, 512, %s14, [#allocation3], 256, 256, 16
    $region5: #{tpu_custom_call.1} parent=1 // pred_fallthru
      _
    // Predicated region
    $region6: #{tpu_custom_call.1} parent=1 // pred_check
      _
    $region7: #{tpu_custom_call.1} parent=1 // pred_check_branch
      %21 = sbr.rel (0) target = $region9
    $region8: #{tpu_custom_call.1} parent=1 // pred_region
      %22 = dma.done [#allocation3], 512
    $region9: #{tpu_custom_call.1} parent=1 // pred_fallthru
      _
    %v23 = vld [vmem:[#allocation2] sm:$0xff]
    %v24 = vld [vmem:[#allocation2 + $0x8] sm:$0xff]
    %v25 = vld [vmem:[#allocation2 + $0x10] sm:$0xff]
    %v26 = vld [vmem:[#allocation2 + $0x18] sm:$0xff]
    %v27 = vxor.u32 %v24, 2147483648
    %v28 = vxor.u32 %v26, 2147483648
    %v29 = vmul.f32 %v27, 1.442695
    %v30 = vpow.pop %v29
    %v31 = vmul.f32 %v28, 1.442695
    %v32 = vpow.pop %v31
    %v33 = vadd.f32 %v30, 1.0
    %v34 = vadd.f32 %v32, 1.0
    %v35 = vrcp.pop %v33
    %v36 = vmul.f32 1.0, %v35
    %v37 = vrcp.pop %v34
    %v38 = vmul.f32 1.0, %v37
    %v39 = vmul.f32 %v23, %v36
    %v40 = vmul.f32 %v25, %v38
    %41 = vst [vmem:[#allocation5] sm:$0xff] %v39
    %42 = vst [vmem:[#allocation5 + $0x8] sm:$0xff] %v40
    // Predicated region
    $region10: #{tpu_custom_call.1} parent=1 // pred_check
      _
    $region11: #{tpu_custom_call.1} parent=1 // pred_check_branch
      %44 = sbr.rel (0) target = $region13
    $region12: #{tpu_custom_call.1} parent=1 // pred_region
      %s46 = ssub.s32 256, 256
      %47 = vsyncadd [#allocation4], %s46
      %s48 = sshll.u32 [#allocation5], 4
      %s49 = int_to_ptr.vmem [resolvable:$true] %s48
      %54 = dma.vmem_to_hbm [thread:$0]  %s49, 256, %s1, [#allocation4], 128, 128, 8
    $region13: #{tpu_custom_call.1} parent=1 // pred_fallthru
      _
    // Predicated region
    $region14: #{tpu_custom_call.1} parent=1 // pred_check
      _
    $region15: #{tpu_custom_call.1} parent=1 // pred_check_branch
      %56 = sbr.rel (0) target = $region17
    $region16: #{tpu_custom_call.1} parent=1 // pred_region
      %57 = dma.done [#allocation4], 256
    $region17: #{tpu_custom_call.1} parent=1 // pred_fallthru
      _
    %58 = vsyncpa [#allocation3], 1
    %59 = vsyncpa [#allocation4], 1

</llo_original>
